<compile_context>
chip_gen: v7x
topology: tpu7x:2x2x1
jax: 0.10.0
libtpu: 0.0.40
codegen_flags: <defaults>
</compile_context>

<pallas_src>
import jax
import jax.numpy as jnp
from jax.experimental import pallas as pl
from jax.experimental.pallas import tpu as pltpu


def _cdiv(a, b):
    return -(-a // b)


def _round_up(n, m):
    return _cdiv(n, m) * m


# Stay well under v5e's 16 MiB default scoped VMEM (also fine on v6e/v7x).
_VMEM_SOFT_BUDGET = 12 * 1024 * 1024


# ----------------------------------------------------------------------------
# Kernel: lane-dense matmul  (tw, V) @ (V, tn) -> (tw, tn), f32 accumulation
# ----------------------------------------------------------------------------
def _nconv_kernel(at_ref, x_ref, o_ref):
    o_ref[...] = jnp.dot(at_ref[...], x_ref[...],
                         preferred_element_type=jnp.float32).astype(o_ref.dtype)


# ----------------------------------------------------------------------------
# Core entry point (lane-dense layout, no wrapper transposes):
#   xm : (V, M)  with M = B*C*L on lanes, node axis V on sublanes
#   A  : (V, W)
#   returns A^T @ xm : (W, M)
# ----------------------------------------------------------------------------
def nconv_lane_dense(xm, A, *, block_n=2048, use_bf16=None, out_dtype=None):
    V, M = xm.shape
    Vk, W = A.shape
    assert Vk == V, (xm.shape, A.shape)

    if use_bf16 is None:                       # auto: bf16 inputs stay bf16 (no f32 pass)
        use_bf16 = (xm.dtype == jnp.bfloat16)
    in_dtype = jnp.bfloat16 if use_bf16 else jnp.float32
    if out_dtype is None:
        out_dtype = xm.dtype
    in_is = jnp.dtype(in_dtype).itemsize
    out_is = jnp.dtype(out_dtype).itemsize

    at = jnp.transpose(A).astype(in_dtype)     # (W, V): tiny, resident across lane tiles
    xm = xm.astype(in_dtype)                   # no-op when dtype already matches

    # Lane tile: multiple of 128, shrunk if the double-buffered footprint would
    # blow the scoped-VMEM budget (keeps pipelining intact on v5e / v7x).
    tn = max(128, min(_round_up(block_n, 128), _round_up(M, 128)))
    while (2 * (W * V * in_is + V * tn * in_is + W * tn * out_is)
           > _VMEM_SOFT_BUDGET and tn > 512):
        tn = max(512, _round_up(tn // 2, 128))
    nm = _cdiv(M, tn)                          # ragged lane edge handled by Pallas

    # If the lane grid collapses to one step (small-M / inference regime), split
    # W across a second parallel axis so v7x's second TensorCore gets work.
    if nm == 1 and W >= 16:
        tw = _round_up(_cdiv(W, 2), 8)         # not full extent -> multiple of 8
    else:
        tw = W                                 # full extent (exempt from (8,128) rule)
    nw = _cdiv(W, tw)

    footprint = 2 * (tw * V * in_is + V * tn * in_is + tw * tn * out_is)
    vmem_limit = int(min(64 * 1024 * 1024,
                         max(8 * 1024 * 1024, int(1.5 * footprint) + (2 << 20))))

    cost = pl.CostEstimate(
        flops=2 * W * V * M,
        transcendentals=0,
        bytes_accessed=V * M * in_is + W * V * in_is + W * M * out_is)

    return pl.pallas_call(
        _nconv_kernel,
        out_shape=jax.ShapeDtypeStruct((W, M), out_dtype),
        grid=(nw, nm),
        in_specs=[
            pl.BlockSpec((tw, V), lambda w, j: (w, 0)),   # A^T tile, resident over lanes
            pl.BlockSpec((V, tn), lambda w, j: (0, j)),   # activation lane tile
        ],
        out_specs=pl.BlockSpec((tw, tn), lambda w, j: (w, j)),  # lane-dense output
        compiler_params=pltpu.CompilerParams(
            dimension_semantics=("parallel", "parallel"),
            vmem_limit_bytes=vmem_limit),
        cost_estimate=cost,
    )(at, xm)


# ----------------------------------------------------------------------------
# Torch-layout wrapper:  y[b,c,w,l] = sum_v x[b,c,v,l] * A[v,w]
# ----------------------------------------------------------------------------
def nconv(x, A, *, block_n=2048, use_bf16=None):
    """einsum('ncvl,vw->ncwl', x, A) with x:(B,C,V,L), A:(V,W)."""
    B, C, V, L = x.shape
    W = A.shape[1]
    M = B * C * L
    # TODO(synk): in a full GraphWN forward, keep activations in the lane-dense
    # (V, B*C*L) layout across hops/layers (or fuse these transposes into the
    # adjacent 1x1 convs) and call nconv_lane_dense directly — the two
    # transposes below are standalone HBM copies needed only to reproduce the
    # bare einsum's ncvl layout.
    xm = jnp.transpose(x, (2, 0, 1, 3)).reshape(V, M)
    ym = nconv_lane_dense(xm, A, block_n=block_n, use_bf16=use_bf16,
                          out_dtype=x.dtype)
    return jnp.transpose(ym.reshape(W, B, C, L), (1, 2, 0, 3))


def nconv_multi(x, A_list, *, concat_output=True, **kw):
    """Apply several diffusion operators (supports) with ONE matmul.

    Operators are concatenated along W so the kernel runs once.  By default the
    result stays concatenated, (B, C, K*W, L) — Graph WaveNet concatenates the
    per-support outputs along channels before the next 1x1 conv anyway, so no
    per-support slices / output copies are materialized.
    """
    A_cat = jnp.concatenate(list(A_list), axis=1)            # (V, K*W)
    y = nconv(x, A_cat, **kw)                                # (B, C, K*W, L)
    if concat_output:
        return y
    W = A_list[0].shape[1]
    return [y[:, :, k * W:(k + 1) * W, :] for k in range(len(A_list))]


# ----------------------------------------------------------------------------
if __name__ == "__main__":
    key = jax.random.PRNGKey(0)
    kx, ka, kx2, ka2 = jax.random.split(key, 4)

    # --- 1) shapes consistent with GraphWN usage: x is (B, C, V, L) ----------
    B, C, V, L = 2, 32, 8, 13                       # M = B*C*L = 832 lanes
    x = jax.random.normal(kx, (B, C, V, L), jnp.float32)
    A = jax.random.uniform(ka, (V, V), jnp.float32)
    A = A / jnp.sum(A, axis=1, keepdims=True)       # row-normalized support (as in GraphWN)

    y = jax.block_until_ready(nconv(x, A))
    ref = jnp.einsum('ncvl,vw->ncwl', x, A, precision=jax.lax.Precision.HIGHEST)
    assert y.shape == ref.shape == (B, C, V, L), y.shape
    assert bool(jnp.all(jnp.isfinite(y)))
    assert bool(jnp.allclose(y, ref, atol=1e-2, rtol=1e-2)), \
        float(jnp.max(jnp.abs(y - ref)))

    # bf16 operands / f32 accumulation (v6e / v7x MXU-native path).
    yb = jax.block_until_ready(nconv(x, A, use_bf16=True))
    assert bool(jnp.allclose(yb, ref, atol=5e-2, rtol=5e-2))

    # --- 2) ragged W edge + W-split parallel axis (single lane tile) ---------
    B2, C2, V2, L2 = 2, 16, 24, 37                  # M = 1184, W = 24 -> 2 W-tiles of 16
    x2 = jax.random.normal(kx2, (B2, C2, V2, L2), jnp.float32)
    A2 = jax.random.uniform(ka2, (V2, V2), jnp.float32)
    A2 = A2 / jnp.sum(A2, axis=1, keepdims=True)
    y2 = jax.block_until_ready(nconv(x2, A2))
    r2 = jnp.einsum('ncvl,vw->ncwl', x2, A2, precision=jax.lax.Precision.HIGHEST)
    assert bool(jnp.allclose(y2, r2, atol=1e-2, rtol=1e-2))

    # --- 3) ragged lane edge with multiple lane tiles -------------------------
    y3 = jax.block_until_ready(nconv(x2, A2, block_n=256))   # 5 lane tiles, last ragged
    assert bool(jnp.allclose(y3, r2, atol=1e-2, rtol=1e-2))

    # --- 4) fused multi-support variant (forward + backward diffusion) -------
    y_cat = jax.block_until_ready(nconv_multi(x, [A, A.T]))  # (B, C, 2*V, L)
    r_cat = jnp.concatenate(
        [jnp.einsum('ncvl,vw->ncwl', x, Ak, precision=jax.lax.Precision.HIGHEST)
         for Ak in (A, A.T)], axis=2)
    assert y_cat.shape == r_cat.shape == (B, C, 2 * V, L)
    assert bool(jnp.allclose(y_cat, r_cat, atol=1e-2, rtol=1e-2))

    print("KERNEL_OK")
</pallas_src>

<mosaic_0001>
module attributes {stable_mosaic.version = 11 : i64} {
  func.func @_nconv_kernel(%arg0: i32, %arg1: i32, %arg2: memref<8x8xf32, #tpu.memory_space<vmem>>, %arg3: memref<8x896xf32, #tpu.memory_space<vmem>>, %arg4: memref<8x896xf32, #tpu.memory_space<vmem>>) attributes {dimension_semantics = [#tpu.dimension_semantics<parallel>, #tpu.dimension_semantics<parallel>], iteration_bounds = array<i64: 1, 1>, scalar_prefetch = 0 : i64, scratch_operands = 0 : i64, tpu.core_type = #tpu.core_type<tc>, window_params = [{transform_indices = @transform_0, window_bounds = array<i64: 8, 8>}, {transform_indices = @transform_1, window_bounds = array<i64: 8, 896>}, {transform_indices = @transform_2, window_bounds = array<i64: 8, 896>}]} {
    %c0 = arith.constant 0 : index
    %c0_0 = arith.constant 0 : index
    %0 = vector.load %arg2[%c0, %c0_0] : memref<8x8xf32, #tpu.memory_space<vmem>>, vector<8x8xf32>
    %c0_1 = arith.constant 0 : index
    %c0_2 = arith.constant 0 : index
    %1 = vector.load %arg3[%c0_1, %c0_2] : memref<8x896xf32, #tpu.memory_space<vmem>>, vector<8x896xf32>
    %cst = arith.constant dense<0.000000e+00> : vector<8x896xf32>
    %2 = tpu.matmul %0, %1, %cst {dimension_numbers = #tpu.dot_dimension_numbers<[1], [0], [0], [1], [0, 0, 1, 1], [], []>} : vector<8x8xf32>, vector<8x896xf32>, vector<8x896xf32> -> vector<8x896xf32>
    %c0_3 = arith.constant 0 : index
    %c0_4 = arith.constant 0 : index
    %3 = vector.load %arg4[%c0_3, %c0_4] : memref<8x896xf32, #tpu.memory_space<vmem>>, vector<8x896xf32>
    tpu.vector_store %arg4[%c0_3, %c0_4], %2 {strides = array<i32>} : memref<8x896xf32, #tpu.memory_space<vmem>>, vector<8x896xf32>,
    return
  }
  func.func @transform_0(%arg0: i32, %arg1: i32) -> (i32, i32) {
    %c0_i32 = arith.constant 0 : i32
    %c0_i32_0 = arith.constant 0 : i32
    return %arg0, %c0_i32 : i32, i32
  }
  func.func @transform_1(%arg0: i32, %arg1: i32) -> (i32, i32) {
    %c0_i32 = arith.constant 0 : i32
    %c0_i32_0 = arith.constant 0 : i32
    return %c0_i32, %arg1 : i32, i32
  }
  func.func @transform_2(%arg0: i32, %arg1: i32) -> (i32, i32) {
    %c0_i32 = arith.constant 0 : i32
    return %arg0, %arg1 : i32, i32
  }
}

</mosaic_0001>

<llo_original>
// kernel: tpu_custom_call.1
$region0: #{tpu_custom_call.1}
  #allocation0 [shape = 'u32[]', space=smem, size = 0x4, offset = 0x4, fixed_abs, tag = 'smem constant byte address 0x4 - core index']
  #allocation1 [shape = 'u32[144,128]{1,0:T(1,128)}', space=vmem, size = 0x12000, scoped, tag = 'internal scratch']
  %s0 = inlined_call_operand.hbm [shape: f32[8,8], index: 0, kind: input, shape index: {}]
  %s1 = inlined_call_operand.hbm [shape: f32[8,832], index: 1, kind: input, shape index: {}]
  %s2 = inlined_call_operand.hbm [shape: f32[8,832], index: 2, kind: output, shape index: {}]
  %s3 = sld [smem:[#allocation0]]
  $region26: #{tpu_custom_call.1} parent=0
    _
  %s5 = ssub.s32 1, %s3
  %s6 = scalar_select 0, %s5, %s3
  $region1: #{tpu_custom_call.1} parent=0
    #allocation2 [shape = 'u8[4096]{0}', space=vmem, size = 0x1000, scoped, tag = 'input window, operand 0, single buffered']
    #allocation3 [shape = 's32[1]{0}', space=sflag, size = 0x4, scoped, tag = 'scoped memory for tpu_custom_call.1']
    #allocation4 [shape = 's32[1]{0}', space=sflag, size = 0x4, scoped, tag = 'scoped memory for tpu_custom_call.1']
    #allocation5 [shape = 'u8[28672]{0}', space=vmem, size = 0x7000, scoped, tag = 'input window, operand 1, single buffered']
    #allocation6 [shape = 's32[1]{0}', space=sflag, size = 0x4, scoped, tag = 'scoped memory for tpu_custom_call.1']
    #allocation7 [shape = 'u8[28672]{0}', space=vmem, size = 0x7000, scoped, tag = 'output window, operand 0, single buffered']
    %7 = vsyncpa [#allocation3], 0
    %8 = vsyncpa [#allocation6], 0
    %9 = vsyncpa [#allocation4], 0
    // Predicated region
    $region2: #{tpu_custom_call.1} parent=1 // pred_check
      _
    $region3: #{tpu_custom_call.1} parent=1 // pred_check_branch
      %11 = sbr.rel (0) target = $region5
    $region4: #{tpu_custom_call.1} parent=1 // pred_region
      %s13 = ssub.s32 128, 128
      %14 = vsyncadd [#allocation3], %s13
      %s16 = sshll.u32 [#allocation2], 4
      %s17 = int_to_ptr.vmem [resolvable:$true] %s16
      %19 = dma.hbm_to_vmem [thread:$0]  %s0, 128, %s17, [#allocation3]
    $region5: #{tpu_custom_call.1} parent=1 // pred_fallthru
      _
    // Predicated region
    $region6: #{tpu_custom_call.1} parent=1 // pred_check
      _
    $region7: #{tpu_custom_call.1} parent=1 // pred_check_branch
      %21 = sbr.rel (0) target = $region9
    $region8: #{tpu_custom_call.1} parent=1 // pred_region
      %s23 = ssub.s32 896, 896
      %24 = vsyncadd [#allocation6], %s23
      %s26 = sshll.u32 [#allocation5], 4
      %s27 = int_to_ptr.vmem [resolvable:$true] %s26
      %29 = dma.hbm_to_vmem [thread:$0]  %s1, 896, %s27, [#allocation6]
    $region9: #{tpu_custom_call.1} parent=1 // pred_fallthru
      _
    // Predicated region
    $region10: #{tpu_custom_call.1} parent=1 // pred_check
      _
    $region11: #{tpu_custom_call.1} parent=1 // pred_check_branch
      %31 = sbr.rel (0) target = $region13
    $region12: #{tpu_custom_call.1} parent=1 // pred_region
      %32 = dma.done [#allocation3], 128
    $region13: #{tpu_custom_call.1} parent=1 // pred_fallthru
      _
    // Predicated region
    $region14: #{tpu_custom_call.1} parent=1 // pred_check
      _
    $region15: #{tpu_custom_call.1} parent=1 // pred_check_branch
      %34 = sbr.rel (0) target = $region17
    $region16: #{tpu_custom_call.1} parent=1 // pred_region
      %35 = dma.done [#allocation6], 896
    $region17: #{tpu_custom_call.1} parent=1 // pred_fallthru
      _
    %v36 = vld [vmem:[#allocation2] sm:$0xff]
    %v37 = vld [vmem:[#allocation5] sm:$0xff]
    %v38 = vld [vmem:[#allocation5 + $0x8] sm:$0xff]
    %v39 = vld [vmem:[#allocation5 + $0x10] sm:$0xff]
    %v40 = vld [vmem:[#allocation5 + $0x18] sm:$0xff]
    %v41 = vld [vmem:[#allocation5 + $0x20] sm:$0xff]
    %v42 = vld [vmem:[#allocation5 + $0x28] sm:$0xff]
    %v43 = vld [vmem:[#allocation5 + $0x30] sm:$0xff]
    %vm44 = vcmask 64512
    %v46 = vsel %vm44, %v36, 0
    %48 = vmatprep.subr.mxu0 %v38
    %49 = vmatpush1.msra.mxu0 %v37
    %50 = vmatprep.subr.mxu0 0.0
    %51 = vmatpush1.msra.mxu0 0.0
    %52 = vmatprep.subr.mxu0 0.0
    %53 = vmatpush1.msra.mxu0 0.0
    %54 = vmatprep.subr.mxu0 0.0
    %55 = vmatpush1.msra.mxu0 0.0
    %56 = vmatprep.subr.mxu0 0.0
    %57 = vmatpush1.msra.mxu0 0.0
    %58 = vmatprep.subr.mxu0 0.0
    %59 = vmatpush1.msra.mxu0 0.0
    %60 = vmatprep.subr.mxu0 0.0
    %61 = vmatpush1.msra.mxu0 0.0
    %62 = vmatprep.subr.mxu0 0.0
    %63 = vmatpush1.msra.mxu0 0.0
    %64 = vmatprep.subr.mxu0 0.0
    %65 = vmatpush1.msra.mxu0 0.0
    %66 = vmatprep.subr.mxu0 0.0
    %67 = vmatpush1.msra.mxu0 0.0
    %68 = vmatprep.subr.mxu0 0.0
    %69 = vmatpush1.msra.mxu0 0.0
    %70 = vmatprep.subr.mxu0 0.0
    %71 = vmatpush1.msra.mxu0 0.0
    %72 = vmatprep.subr.mxu0 0.0
    %73 = vmatpush1.msra.mxu0 0.0
    %74 = vmatprep.subr.mxu0 0.0
    %75 = vmatpush1.msra.mxu0 0.0
    %76 = vmatprep.subr.mxu0 0.0
    %77 = vmatpush1.msra.mxu0 0.0
    %78 = vmatprep.subr.mxu0 0.0
    %79 = vmatpush1.msra.mxu0 0.0
    %80 = vmatprep.subr.mxu0 0.0
    %81 = vmatpush1.msra.mxu0 0.0
    %82 = vmatprep.subr.mxu0 0.0
    %83 = vmatpush1.msra.mxu0 0.0
    %84 = vmatprep.subr.mxu0 0.0
    %85 = vmatpush1.msra.mxu0 0.0
    %86 = vmatprep.subr.mxu0 0.0
    %87 = vmatpush1.msra.mxu0 0.0
    %88 = vmatprep.subr.mxu0 0.0
    %89 = vmatpush1.msra.mxu0 0.0
    %90 = vmatprep.subr.mxu0 0.0
    %91 = vmatpush1.msra.mxu0 0.0
    %92 = vmatprep.subr.mxu0 0.0
    %93 = vmatpush1.msra.mxu0 0.0
    %94 = vmatprep.subr.mxu0 0.0
    %95 = vmatpush1.msra.mxu0 0.0
    %96 = vmatprep.subr.mxu0 0.0
    %97 = vmatpush1.msra.mxu0 0.0
    %98 = vmatprep.subr.mxu0 0.0
    %99 = vmatpush1.msra.mxu0 0.0
    %100 = vmatprep.subr.mxu0 0.0
    %101 = vmatpush1.msra.mxu0 0.0
    %102 = vmatprep.subr.mxu0 0.0
    %103 = vmatpush1.msra.mxu0 0.0
    %104 = vmatprep.subr.mxu0 0.0
    %105 = vmatpush1.msra.mxu0 0.0
    %106 = vmatprep.subr.mxu0 0.0
    %107 = vmatpush1.msra.mxu0 0.0
    %108 = vmatprep.subr.mxu0 0.0
    %109 = vmatpush1.msra.mxu0 0.0
    %110 = vmatprep.subr.mxu0 0.0
    %111 = vmatpush1.msra.mxu0 0.0
    %112 = vmatprep.mubr.f32.mxu0 0.0
    %113 = vmatmul.mubr.f32.gmra.mrb[0].mxu0 %v46
    %v114 = vpop.f32.mrb[0].mxu0
    %v115 = vadd.f32 0.0, %v114
    %v116 = vpop.f32.mrb[0].mxu0
    %v117 = vadd.f32 0.0, %v116
    %118 = vdwg.mxu0
    %119 = vmatprep.subr.mxu0 %v40
    %120 = vmatpush1.msra.mxu0 %v39
    %121 = vmatprep.subr.mxu0 0.0
    %122 = vmatpush1.msra.mxu0 0.0
    %123 = vmatprep.subr.mxu0 0.0
    %124 = vmatpush1.msra.mxu0 0.0
    %125 = vmatprep.subr.mxu0 0.0
    %126 = vmatpush1.msra.mxu0 0.0
    %127 = vmatprep.subr.mxu0 0.0
    %128 = vmatpush1.msra.mxu0 0.0
    %129 = vmatprep.subr.mxu0 0.0
    %130 = vmatpush1.msra.mxu0 0.0
    %131 = vmatprep.subr.mxu0 0.0
    %132 = vmatpush1.msra.mxu0 0.0
    %133 = vmatprep.subr.mxu0 0.0
    %134 = vmatpush1.msra.mxu0 0.0
    %135 = vmatprep.subr.mxu0 0.0
    %136 = vmatpush1.msra.mxu0 0.0
    %137 = vmatprep.subr.mxu0 0.0
    %138 = vmatpush1.msra.mxu0 0.0
    %139 = vmatprep.subr.mxu0 0.0
    %140 = vmatpush1.msra.mxu0 0.0
    %141 = vmatprep.subr.mxu0 0.0
    %142 = vmatpush1.msra.mxu0 0.0
    %143 = vmatprep.subr.mxu0 0.0
    %144 = vmatpush1.msra.mxu0 0.0
    %145 = vmatprep.subr.mxu0 0.0
    %146 = vmatpush1.msra.mxu0 0.0
    %147 = vmatprep.subr.mxu0 0.0
    %148 = vmatpush1.msra.mxu0 0.0
    %149 = vmatprep.subr.mxu0 0.0
    %150 = vmatpush1.msra.mxu0 0.0
    %151 = vmatprep.subr.mxu0 0.0
    %152 = vmatpush1.msra.mxu0 0.0
    %153 = vmatprep.subr.mxu0 0.0
    %154 = vmatpush1.msra.mxu0 0.0
    %155 = vmatprep.subr.mxu0 0.0
    %156 = vmatpush1.msra.mxu0 0.0
    %157 = vmatprep.subr.mxu0 0.0
    %158 = vmatpush1.msra.mxu0 0.0
    %159 = vmatprep.subr.mxu0 0.0
    %160 = vmatpush1.msra.mxu0 0.0
    %161 = vmatprep.subr.mxu0 0.0
    %162 = vmatpush1.msra.mxu0 0.0
    %163 = vmatprep.subr.mxu0 0.0
    %164 = vmatpush1.msra.mxu0 0.0
    %165 = vmatprep.subr.mxu0 0.0
    %166 = vmatpush1.msra.mxu0 0.0
    %167 = vmatprep.subr.mxu0 0.0
    %168 = vmatpush1.msra.mxu0 0.0
    %169 = vmatprep.subr.mxu0 0.0
    %170 = vmatpush1.msra.mxu0 0.0
    %171 = vmatprep.subr.mxu0 0.0
    %172 = vmatpush1.msra.mxu0 0.0
    %173 = vmatprep.subr.mxu0 0.0
    %174 = vmatpush1.msra.mxu0 0.0
    %175 = vmatprep.subr.mxu0 0.0
    %176 = vmatpush1.msra.mxu0 0.0
    %177 = vmatprep.subr.mxu0 0.0
    %178 = vmatpush1.msra.mxu0 0.0
    %179 = vmatprep.subr.mxu0 0.0
    %180 = vmatpush1.msra.mxu0 0.0
    %181 = vmatprep.subr.mxu0 0.0
    %182 = vmatpush1.msra.mxu0 0.0
    %183 = vmatprep.mubr.f32.mxu0 0.0
    %184 = vmatmul.mubr.f32.gmra.mrb[0].mxu0 %v46
    %v185 = vpop.f32.mrb[0].mxu0
    %v186 = vadd.f32 0.0, %v185
    %v187 = vpop.f32.mrb[0].mxu0
    %v188 = vadd.f32 0.0, %v187
    %189 = vdwg.mxu0
    %190 = vmatprep.subr.mxu0 %v42
    %191 = vmatpush1.msra.mxu0 %v41
    %192 = vmatprep.subr.mxu0 0.0
    %193 = vmatpush1.msra.mxu0 0.0
    %194 = vmatprep.subr.mxu0 0.0
    %195 = vmatpush1.msra.mxu0 0.0
    %196 = vmatprep.subr.mxu0 0.0
    %197 = vmatpush1.msra.mxu0 0.0
    %198 = vmatprep.subr.mxu0 0.0
    %199 = vmatpush1.msra.mxu0 0.0
    %200 = vmatprep.subr.mxu0 0.0
    %201 = vmatpush1.msra.mxu0 0.0
    %202 = vmatprep.subr.mxu0 0.0
    %203 = vmatpush1.msra.mxu0 0.0
    %204 = vmatprep.subr.mxu0 0.0
    %205 = vmatpush1.msra.mxu0 0.0
    %206 = vmatprep.subr.mxu0 0.0
    %207 = vmatpush1.msra.mxu0 0.0
    %208 = vmatprep.subr.mxu0 0.0
    %209 = vmatpush1.msra.mxu0 0.0
    %210 = vmatprep.subr.mxu0 0.0
    %211 = vmatpush1.msra.mxu0 0.0
    %212 = vmatprep.subr.mxu0 0.0
    %213 = vmatpush1.msra.mxu0 0.0
    %214 = vmatprep.subr.mxu0 0.0
    %215 = vmatpush1.msra.mxu0 0.0
    %216 = vmatprep.subr.mxu0 0.0
    %217 = vmatpush1.msra.mxu0 0.0
    %218 = vmatprep.subr.mxu0 0.0
    %219 = vmatpush1.msra.mxu0 0.0
    %220 = vmatprep.subr.mxu0 0.0
    %221 = vmatpush1.msra.mxu0 0.0
    %222 = vmatprep.subr.mxu0 0.0
    %223 = vmatpush1.msra.mxu0 0.0
    %224 = vmatprep.subr.mxu0 0.0
    %225 = vmatpush1.msra.mxu0 0.0
    %226 = vmatprep.subr.mxu0 0.0
    %227 = vmatpush1.msra.mxu0 0.0
    %228 = vmatprep.subr.mxu0 0.0
    %229 = vmatpush1.msra.mxu0 0.0
    %230 = vmatprep.subr.mxu0 0.0
    %231 = vmatpush1.msra.mxu0 0.0
    %232 = vmatprep.subr.mxu0 0.0
    %233 = vmatpush1.msra.mxu0 0.0
    %234 = vmatprep.subr.mxu0 0.0
    %235 = vmatpush1.msra.mxu0 0.0
    %236 = vmatprep.subr.mxu0 0.0
    %237 = vmatpush1.msra.mxu0 0.0
    %238 = vmatprep.subr.mxu0 0.0
    %239 = vmatpush1.msra.mxu0 0.0
    %240 = vmatprep.subr.mxu0 0.0
    %241 = vmatpush1.msra.mxu0 0.0
    %242 = vmatprep.subr.mxu0 0.0
    %243 = vmatpush1.msra.mxu0 0.0
    %244 = vmatprep.subr.mxu0 0.0
    %245 = vmatpush1.msra.mxu0 0.0
    %246 = vmatprep.subr.mxu0 0.0
    %247 = vmatpush1.msra.mxu0 0.0
    %248 = vmatprep.subr.mxu0 0.0
    %249 = vmatpush1.msra.mxu0 0.0
    %250 = vmatprep.subr.mxu0 0.0
    %251 = vmatpush1.msra.mxu0 0.0
    %252 = vmatprep.subr.mxu0 0.0
    %253 = vmatpush1.msra.mxu0 0.0
    %254 = vmatprep.mubr.f32.mxu0 0.0
    %255 = vmatmul.mubr.f32.gmra.mrb[0].mxu0 %v46
    %v256 = vpop.f32.mrb[0].mxu0
    %v257 = vadd.f32 0.0, %v256
    %v258 = vpop.f32.mrb[0].mxu0
    %v259 = vadd.f32 0.0, %v258
    %260 = vdwg.mxu0
    %261 = vmatprep.subr.mxu0 0.0
    %262 = vmatpush1.msra.mxu0 %v43
    %263 = vmatprep.subr.mxu0 0.0
    %264 = vmatpush1.msra.mxu0 0.0
    %265 = vmatprep.subr.mxu0 0.0
    %266 = vmatpush1.msra.mxu0 0.0
    %267 = vmatprep.subr.mxu0 0.0
    %268 = vmatpush1.msra.mxu0 0.0
    %269 = vmatprep.subr.mxu0 0.0
    %270 = vmatpush1.msra.mxu0 0.0
    %271 = vmatprep.subr.mxu0 0.0
    %272 = vmatpush1.msra.mxu0 0.0
    %273 = vmatprep.subr.mxu0 0.0
    %274 = vmatpush1.msra.mxu0 0.0
    %275 = vmatprep.subr.mxu0 0.0
    %276 = vmatpush1.msra.mxu0 0.0
    %277 = vmatprep.subr.mxu0 0.0
    %278 = vmatpush1.msra.mxu0 0.0
    %279 = vmatprep.subr.mxu0 0.0
    %280 = vmatpush1.msra.mxu0 0.0
    %281 = vmatprep.subr.mxu0 0.0
    %282 = vmatpush1.msra.mxu0 0.0
    %283 = vmatprep.subr.mxu0 0.0
    %284 = vmatpush1.msra.mxu0 0.0
    %285 = vmatprep.subr.mxu0 0.0
    %286 = vmatpush1.msra.mxu0 0.0
    %287 = vmatprep.subr.mxu0 0.0
    %288 = vmatpush1.msra.mxu0 0.0
    %289 = vmatprep.subr.mxu0 0.0
    %290 = vmatpush1.msra.mxu0 0.0
    %291 = vmatprep.subr.mxu0 0.0
    %292 = vmatpush1.msra.mxu0 0.0
    %293 = vmatprep.subr.mxu0 0.0
    %294 = vmatpush1.msra.mxu0 0.0
    %295 = vmatprep.subr.mxu0 0.0
    %296 = vmatpush1.msra.mxu0 0.0
    %297 = vmatprep.subr.mxu0 0.0
    %298 = vmatpush1.msra.mxu0 0.0
    %299 = vmatprep.subr.mxu0 0.0
    %300 = vmatpush1.msra.mxu0 0.0
    %301 = vmatprep.subr.mxu0 0.0
    %302 = vmatpush1.msra.mxu0 0.0
    %303 = vmatprep.subr.mxu0 0.0
    %304 = vmatpush1.msra.mxu0 0.0
    %305 = vmatprep.subr.mxu0 0.0
    %306 = vmatpush1.msra.mxu0 0.0
    %307 = vmatprep.subr.mxu0 0.0
    %308 = vmatpush1.msra.mxu0 0.0
    %309 = vmatprep.subr.mxu0 0.0
    %310 = vmatpush1.msra.mxu0 0.0
    %311 = vmatprep.subr.mxu0 0.0
    %312 = vmatpush1.msra.mxu0 0.0
    %313 = vmatprep.subr.mxu0 0.0
    %314 = vmatpush1.msra.mxu0 0.0
    %315 = vmatprep.subr.mxu0 0.0
    %316 = vmatpush1.msra.mxu0 0.0
    %317 = vmatprep.subr.mxu0 0.0
    %318 = vmatpush1.msra.mxu0 0.0
    %319 = vmatprep.subr.mxu0 0.0
    %320 = vmatpush1.msra.mxu0 0.0
    %321 = vmatprep.subr.mxu0 0.0
    %322 = vmatpush1.msra.mxu0 0.0
    %323 = vmatprep.subr.mxu0 0.0
    %324 = vmatpush1.msra.mxu0 0.0
    %325 = vmatprep.mubr.f32.mxu0 0.0
    %326 = vmatmul.mubr.f32.gmra.mrb[0].mxu0 %v46
    %v327 = vpop.f32.mrb[0].mxu0
    %v328 = vadd.f32 0.0, %v327
    %v329 = vpop.f32.mrb[0].mxu0
    %330 = vdwg.mxu0
    %331 = vst [vmem:[#allocation7] sm:$0xff] %v115
    %332 = vst [vmem:[#allocation7 + $0x8] sm:$0xff] %v117
    %333 = vst [vmem:[#allocation7 + $0x10] sm:$0xff] %v186
    %334 = vst [vmem:[#allocation7 + $0x18] sm:$0xff] %v188
    %335 = vst [vmem:[#allocation7 + $0x20] sm:$0xff] %v257
    %336 = vst [vmem:[#allocation7 + $0x28] sm:$0xff] %v259
    %337 = vst [vmem:[#allocation7 + $0x30] sm:$0xff] %v328
    // Predicated region
    $region18: #{tpu_custom_call.1} parent=1 // pred_check
      _
    $region19: #{tpu_custom_call.1} parent=1 // pred_check_branch
      %339 = sbr.rel (0) target = $region21
    $region20: #{tpu_custom_call.1} parent=1 // pred_region
      %s341 = ssub.s32 896, 896
      %342 = vsyncadd [#allocation4], %s341
      %s344 = sshll.u32 [#allocation7], 4
      %s345 = int_to_ptr.vmem [resolvable:$true] %s344
      %347 = dma.vmem_to_hbm [thread:$0]  %s345, 896, %s2, [#allocation4]
    $region21: #{tpu_custom_call.1} parent=1 // pred_fallthru
      _
    // Predicated region
    $region22: #{tpu_custom_call.1} parent=1 // pred_check
      _
    $region23: #{tpu_custom_call.1} parent=1 // pred_check_branch
      %349 = sbr.rel (0) target = $region25
    $region24: #{tpu_custom_call.1} parent=1 // pred_region
      %350 = dma.done [#allocation4], 896
    $region25: #{tpu_custom_call.1} parent=1 // pred_fallthru
      _
    %351 = vsyncpa [#allocation3], 1
    %352 = vsyncpa [#allocation6], 1
    %353 = vsyncpa [#allocation4], 1

</llo_original>
